<compile_context>
chip_gen: v5e
topology: v5e:2x2
jax: 0.10.0
libtpu: 0.0.40
codegen_flags: <defaults>
</compile_context>

<pallas_src>
import jax
import jax.numpy as jnp
from jax.experimental import pallas as pl
from jax.experimental.pallas import tpu as pltpu

_LANES = 128


def _diag_kernel(x_ref, w_ref, o_ref):
    # x_ref: (tm, tn) tile of input rows; w_ref: (1, tn) diag-weights slice.
    o_ref[...] = x_ref[...] * w_ref[...]


def _round_up(x, m):
    return (x + m - 1) // m * m


def _chip_kind():
    try:
        return jax.devices()[0].device_kind.lower()
    except Exception:  # pragma: no cover - CPU interpret fallback etc.
        return ""


def _default_block_bytes(kind):
    if "v7" in kind:
        return 6 << 20   # ~3.2 TB/s per TC: large tiles amortize per-step overhead
    if "v6" in kind:
        return 4 << 20   # 4 MiB-class blocks measured ~86% of HBM roofline
    if "v5" in kind:
        return 2 << 20   # keep 4x tile under the 16 MiB default scoped VMEM
    return 4 << 20


def diag_forward(x, w, *, target_block_bytes=None, min_kernel_bytes=256 << 10):
    """Compute x @ diag(w) with a Pallas TPU kernel.

    x: (N, D) array, w: (D,) diagonal weights.
    """
    N, D = x.shape
    assert w.shape == (D,), f"w must be shape ({D},), got {w.shape}"
    # NOTE: multiply happens in x.dtype (PyTorch promotes instead; cast the
    # product if bit-level parity with mixed-precision W ever matters).
    w = w.astype(x.dtype)

    itemsize = jnp.dtype(x.dtype).itemsize

    # Tiny inputs: launch + pipeline setup dominates; let XLA fuse it.
    if N * D * itemsize < min_kernel_bytes:
        return x * w[None, :]

    kind = _chip_kind()
    is_v7x = "v7" in kind
    if target_block_bytes is None:
        target_block_bytes = _default_block_bytes(kind)

    # ---- lane-dense shape plumbing (free row-major refold for small D) -----
    x2, w2, folded = x, w, False
    if D < _LANES and D % _LANES != 0 and _LANES % D == 0 and N % (_LANES // D) == 0:
        k = _LANES // D
        x2 = x.reshape(N // k, k * D)         # pure layout plumbing, no copy math
        w2 = jnp.tile(w, k)
        folded = True
    N2, D2 = x2.shape
    w2 = w2.reshape(1, D2)

    # ---- tile sizing --------------------------------------------------------
    sublane = max(8, 32 // itemsize)          # 8 for f32, 16 for bf16, ...
    row_bytes = D2 * itemsize

    if sublane * row_bytes <= target_block_bytes:
        # Full-width column tile: contiguous HBM blocks, W never re-fetched.
        tn = D2
    else:
        tn = max(_LANES,
                 (target_block_bytes // (sublane * itemsize)) // _LANES * _LANES)
        tn = min(tn, D2)

    tm = max(sublane,
             (target_block_bytes // (tn * itemsize)) // sublane * sublane)
    if tm >= N2:
        tm = N2                               # full extent is always legal

    ni = pl.cdiv(N2, tm)
    nj = pl.cdiv(D2, tn)

    # v7x megacore guard: don't idle a TensorCore with a 1-block parallel axis.
    if is_v7x and ni == 1 and N2 >= 2 * sublane:
        tm = _round_up((N2 + 1) // 2, sublane)
        ni = pl.cdiv(N2, tm)

    # ---- VMEM budget: x + out double-buffered, plus W slice and slack -------
    block_bytes = tm * tn * itemsize
    vmem_limit = int(4 * block_bytes + 2 * D2 * itemsize + (4 << 20))
    vmem_limit = max(16 << 20, min(48 << 20, vmem_limit))

    if nj == 1:
        # 1-D grid over rows; W block index constant -> fetched once.
        grid = (ni,)
        in_specs = [
            pl.BlockSpec((tm, tn), lambda i: (i, 0)),
            pl.BlockSpec((1, tn), lambda i: (0, 0)),
        ]
        out_specs = pl.BlockSpec((tm, tn), lambda i: (i, 0))
        dims = ("parallel",)
    else:
        # Feature tiles outer, row tiles inner -> W block constant over the
        # inner loop, so its copy is skipped across inner steps.
        grid = (nj, ni)
        in_specs = [
            pl.BlockSpec((tm, tn), lambda j, i: (i, j)),
            pl.BlockSpec((1, tn), lambda j, i: (0, j)),
        ]
        out_specs = pl.BlockSpec((tm, tn), lambda j, i: (i, j))
        dims = ("parallel", "parallel")

    out2 = pl.pallas_call(
        _diag_kernel,
        out_shape=jax.ShapeDtypeStruct((N2, D2), x.dtype),
        grid_spec=pltpu.PrefetchScalarGridSpec(
            num_scalar_prefetch=0,
            grid=grid,
            in_specs=in_specs,
            out_specs=out_specs,
        ),
        compiler_params=pltpu.CompilerParams(
            dimension_semantics=dims,
            vmem_limit_bytes=vmem_limit,
        ),
    )(x2, w2)

    if folded:
        return out2.reshape(N, D)
    return out2


if __name__ == "__main__":
    key = jax.random.PRNGKey(0)

    def check(n, d, **kw):
        kx, kwk = jax.random.split(jax.random.fold_in(key, n * 131 + d))
        x = jax.random.normal(kx, (n, d), dtype=jnp.float32)
        W = jax.random.normal(kwk, (d,), dtype=jnp.float32)
        out = jax.block_until_ready(diag_forward(x, W, **kw))
        ref = x * W[None, :]                   # == x @ diag(W), avoids DxD diag
        assert out.shape == ref.shape and out.dtype == ref.dtype
        assert jnp.allclose(out, ref, atol=1e-5, rtol=1e-5), (n, d)

    # Module-consistent small demo: N=8 samples, input_size=32 features
    # (W initialised to ones, exactly as in Diag.__init__). Force the Pallas
    # kernel path so it is exercised even at this tiny size.
    N, input_size = 8, 32
    x = jax.random.normal(key, (N, input_size), dtype=jnp.float32)
    W = jnp.ones((input_size,), dtype=jnp.float32)
    out = jax.block_until_ready(diag_forward(x, W, min_kernel_bytes=0))
    ref = x @ jnp.diag(W)
    assert out.shape == ref.shape and out.dtype == ref.dtype
    assert jnp.allclose(out, ref, atol=1e-6, rtol=1e-6)

    # Exercise the other wrapper paths / grid shapes:
    check(8, 32, min_kernel_bytes=0)                       # fold path (D < 128)
    check(2048, 256)                                       # full-width, multi-row-block grid
    check(513, 100)                                        # ragged D, no pad/slice, masked tail lanes
    check(16, 65536, target_block_bytes=1 << 20,
          min_kernel_bytes=0)                              # column-split (W outer-constant) path

    print("KERNEL_OK")
</pallas_src>

<mosaic_0001>
module attributes {stable_mosaic.version = 11 : i64} {
  func.func @_diag_kernel(%arg0: i32, %arg1: memref<2x128xf32, #tpu.memory_space<vmem>>, %arg2: memref<1x128xf32, #tpu.memory_space<vmem>>, %arg3: memref<2x128xf32, #tpu.memory_space<vmem>>) attributes {dimension_semantics = [#tpu.dimension_semantics<parallel>], iteration_bounds = array<i64: 1>, scalar_prefetch = 0 : i64, scratch_operands = 0 : i64, tpu.core_type = #tpu.core_type<tc>, window_params = [{transform_indices = @transform_0, window_bounds = array<i64: 2, 128>}, {pipeline_mode = #tpu.pipeline_mode<synchronous>, transform_indices = @transform_1, window_bounds = array<i64: 1, 128>}, {transform_indices = @transform_2, window_bounds = array<i64: 2, 128>}]} {
    %c0 = arith.constant 0 : index
    %c0_0 = arith.constant 0 : index
    %0 = vector.load %arg1[%c0, %c0_0] : memref<2x128xf32, #tpu.memory_space<vmem>>, vector<2x128xf32>
    %c0_1 = arith.constant 0 : index
    %c0_2 = arith.constant 0 : index
    %1 = vector.load %arg2[%c0_1, %c0_2] : memref<1x128xf32, #tpu.memory_space<vmem>>, vector<1x128xf32>
    %2 = vector.broadcast %1 : vector<1x128xf32> to vector<2x128xf32>
    %3 = arith.mulf %0, %2 : vector<2x128xf32>
    %c0_3 = arith.constant 0 : index
    %c0_4 = arith.constant 0 : index
    %4 = vector.load %arg3[%c0_3, %c0_4] : memref<2x128xf32, #tpu.memory_space<vmem>>, vector<2x128xf32>
    tpu.vector_store %arg3[%c0_3, %c0_4], %3 {strides = array<i32>} : memref<2x128xf32, #tpu.memory_space<vmem>>, vector<2x128xf32>,
    return
  }
  func.func @transform_0(%arg0: i32) -> (i32, i32) {
    %c0_i32 = arith.constant 0 : i32
    %c0_i32_0 = arith.constant 0 : i32
    return %arg0, %c0_i32 : i32, i32
  }
  func.func @transform_1(%arg0: i32) -> (i32, i32) {
    %c0_i32 = arith.constant 0 : i32
    %c0_i32_0 = arith.constant 0 : i32
    %c0_i32_1 = arith.constant 0 : i32
    return %c0_i32, %c0_i32_0 : i32, i32
  }
  func.func @transform_2(%arg0: i32) -> (i32, i32) {
    %c0_i32 = arith.constant 0 : i32
    %c0_i32_0 = arith.constant 0 : i32
    return %arg0, %c0_i32 : i32, i32
  }
}

</mosaic_0001>

<llo_original>
// kernel: tpu_custom_call.1
$region0: #{tpu_custom_call.1}
  #allocation0 [shape = 'u32[]', space=smem, size = 0x4, offset = 0x4, fixed_abs, tag = 'smem constant byte address 0x4 - core index']
  #allocation1 [shape = 'u32[72,128]{1,0:T(1,128)}', space=vmem, size = 0x9000, scoped, tag = 'internal scratch']
  %s0 = inlined_call_operand.hbm [shape: f32[2,128], index: 0, kind: input, shape index: {}]
  %s1 = inlined_call_operand.hbm [shape: f32[1,128], index: 1, kind: input, shape index: {}]
  %s2 = inlined_call_operand.hbm [shape: f32[2,128], index: 2, kind: output, shape index: {}]
  %s3 = sld [smem:[#allocation0]]
  $region26: #{tpu_custom_call.1} parent=0
    _
  %s5 = ssub.s32 1, %s3
  %s6 = scalar_select 0, %s5, %s3
  $region1: #{tpu_custom_call.1} parent=0
    #allocation2 [shape = 'u8[1024]{0}', space=vmem, size = 0x400, scoped, tag = 'input window, operand 0, single buffered']
    #allocation3 [shape = 's32[1]{0}', space=sflag, size = 0x4, scoped, tag = 'scoped memory for tpu_custom_call.1']
    #allocation4 [shape = 's32[1]{0}', space=sflag, size = 0x4, scoped, tag = 'scoped memory for tpu_custom_call.1']
    #allocation5 [shape = 'u8[512]{0}', space=vmem, size = 0x400, scoped, tag = 'input window, operand 1, single buffered']
    #allocation6 [shape = 's32[1]{0}', space=sflag, size = 0x4, scoped, tag = 'scoped memory for tpu_custom_call.1']
    #allocation7 [shape = 'u8[1024]{0}', space=vmem, size = 0x400, scoped, tag = 'output window, operand 0, single buffered']
    %7 = vsyncpa [#allocation3], 0
    %8 = vsyncpa [#allocation6], 0
    %9 = vsyncpa [#allocation4], 0
    // Predicated region
    $region2: #{tpu_custom_call.1} parent=1 // pred_check
      _
    $region3: #{tpu_custom_call.1} parent=1 // pred_check_branch
      %11 = sbr.rel (0) target = $region5
    $region4: #{tpu_custom_call.1} parent=1 // pred_region
      %13 = vsyncadd [#allocation3], 0
      %s15 = sshll.u32 %s0, 4
      %s16 = int_to_ptr.hbm [resolvable:$true] %s15
      %s17 = sshll.u32 [#allocation2], 4
      %s18 = int_to_ptr.vmem [resolvable:$true] %s17
      %20 = dma.hbm_to_vmem [thread:$0]  %s16, 32, %s18, [#allocation3]
    $region5: #{tpu_custom_call.1} parent=1 // pred_fallthru
      _
    // Predicated region
    $region6: #{tpu_custom_call.1} parent=1 // pred_check
      _
    $region7: #{tpu_custom_call.1} parent=1 // pred_check_branch
      %22 = sbr.rel (0) target = $region9
    $region8: #{tpu_custom_call.1} parent=1 // pred_region
      %24 = vsyncadd [#allocation6], 0
      %s26 = sshll.u32 %s1, 4
      %s27 = int_to_ptr.hbm [resolvable:$true] %s26
      %s28 = sshll.u32 [#allocation5], 4
      %s29 = int_to_ptr.vmem [resolvable:$true] %s28
      %31 = dma.hbm_to_vmem [thread:$0]  %s27, 16, %s29, [#allocation6]
    $region9: #{tpu_custom_call.1} parent=1 // pred_fallthru
      _
    // Predicated region
    $region10: #{tpu_custom_call.1} parent=1 // pred_check
      _
    $region11: #{tpu_custom_call.1} parent=1 // pred_check_branch
      %33 = sbr.rel (0) target = $region13
    $region12: #{tpu_custom_call.1} parent=1 // pred_region
      %35 = dma.done [#allocation3], 32
    $region13: #{tpu_custom_call.1} parent=1 // pred_fallthru
      _
    // Predicated region
    $region14: #{tpu_custom_call.1} parent=1 // pred_check
      _
    $region15: #{tpu_custom_call.1} parent=1 // pred_check_branch
      %37 = sbr.rel (0) target = $region17
    $region16: #{tpu_custom_call.1} parent=1 // pred_region
      %39 = dma.done [#allocation6], 16
    $region17: #{tpu_custom_call.1} parent=1 // pred_fallthru
      _
    %v40 = vld [vmem:[#allocation2] sm:$0x3]
    %v41 = vld [vmem:[#allocation5] sm:$0x1]
    %v43 = vperm.slane %v41, 0
    %v45 = vmul.f32 %v40, %v43
    %46 = vst [vmem:[#allocation7] sm:$0x3] %v45
    // Predicated region
    $region18: #{tpu_custom_call.1} parent=1 // pred_check
      _
    $region19: #{tpu_custom_call.1} parent=1 // pred_check_branch
      %48 = sbr.rel (0) target = $region21
    $region20: #{tpu_custom_call.1} parent=1 // pred_region
      %50 = vsyncadd [#allocation4], 0
      %s52 = sshll.u32 [#allocation7], 4
      %s53 = int_to_ptr.vmem [resolvable:$true] %s52
      %s54 = sshll.u32 %s2, 4
      %s55 = int_to_ptr.hbm [resolvable:$true] %s54
      %57 = dma.vmem_to_hbm [thread:$0]  %s53, 32, %s55, [#allocation4]
    $region21: #{tpu_custom_call.1} parent=1 // pred_fallthru
      _
    // Predicated region
    $region22: #{tpu_custom_call.1} parent=1 // pred_check
      _
    $region23: #{tpu_custom_call.1} parent=1 // pred_check_branch
      %59 = sbr.rel (0) target = $region25
    $region24: #{tpu_custom_call.1} parent=1 // pred_region
      %61 = dma.done [#allocation4], 32
    $region25: #{tpu_custom_call.1} parent=1 // pred_fallthru
      _
    %62 = vsyncpa [#allocation3], 1
    %63 = vsyncpa [#allocation6], 1
    %64 = vsyncpa [#allocation4], 1

</llo_original>
